<compile_context>
chip_gen: v5e
topology: v5e:2x2
jax: 0.10.0
libtpu: 0.0.40
codegen_flags: <defaults>
</compile_context>

<pallas_src>
import functools

import jax
import jax.numpy as jnp
from jax.experimental import pallas as pl
from jax.experimental.pallas import tpu as pltpu


def _focal_ce_kernel(x_ref, t_ref, acc_ref, *, ignore_index, hw, tp, n_inner,
                     ragged):
    """One (batch n, pixel-chunk ch, pixel-tile p) grid step.

    x_ref:   (C, tp)  logits tile (classes on sublanes, pixels on lanes)
    t_ref:   (1, tp)  integer targets
    acc_ref: (2, tp)  row 0: running sum of CE, row 1: running count of
                      non-ignored pixels (per lane, resident per (n, ch))
    """
    ch = pl.program_id(1)
    p = pl.program_id(2)

    @pl.when(p == 0)
    def _():
        acc_ref[...] = jnp.zeros_like(acc_ref)

    x = x_ref[...].astype(jnp.float32)            # (C, tp)
    t = t_ref[...].astype(jnp.int32)              # (1, tp)

    # Numerically stable CE over the class (sublane) axis.  x - m is reused
    # for both the exp() and the one-hot target select (the m terms cancel).
    m = jnp.max(x, axis=0, keepdims=True)                         # (1, tp)
    xm = x - m                                                    # (C, tp)
    sumexp = jnp.sum(jnp.exp(xm), axis=0, keepdims=True)          # (1, tp)
    cls = jax.lax.broadcasted_iota(jnp.int32, x.shape, 0)         # (C, tp)
    # Out-of-range non-ignore targets silently select 0 (PyTorch would raise).
    tgt = jnp.sum(jnp.where(cls == t, xm, 0.0), axis=0, keepdims=True)
    ce = jnp.log(sumexp) - tgt                                    # (1, tp)

    valid = t != ignore_index                                     # (1, tp)

    def accumulate(v):
        # Must be a select (not a multiply) so that garbage lanes of an
        # overhanging tile cannot propagate Inf/NaN into the accumulator.
        contrib = jnp.concatenate(
            [jnp.where(v, ce, 0.0), v.astype(jnp.float32)], axis=0)  # (2, tp)
        acc_ref[...] += contrib

    if not ragged:
        # Exact tile split: no bounds mask anywhere.
        accumulate(valid)
    else:
        gp = ch * n_inner + p                 # global pixel-tile index
        is_edge = (gp + 1) * tp > hw          # tile overhangs (or is past) hw

        @pl.when(jnp.logical_not(is_edge))
        def _():
            accumulate(valid)

        @pl.when(is_edge)
        def _():
            lane = jax.lax.broadcasted_iota(jnp.int32, t.shape, 1)
            in_bounds = (gp * tp + lane) < hw
            accumulate(jnp.logical_and(valid, in_bounds))


def focal_loss(inputs_nchw, targets_nhw, *, num_classes, gamma=2.0,
               reduction='mean', tp=None, n_chunks=None):
    """FocalLoss forward. inputs: (N, C, H, W) float; targets: (N, H, W) int.

    `reduction` 'mean'/'sum'/'none' are identical here because the value is
    already a scalar (see semantics note above).  bf16/f32 logits and any
    integer target dtype are accepted as-is (upcast only inside the kernel).
    """
    # TODO(synk): the PyTorch `alpha` branch (alpha.gather(0, targets) with a
    # 3-D `targets`) raises in PyTorch itself, so only alpha=None is supported.
    N, C, H, W = inputs_nchw.shape
    HW = H * W

    # Free (metadata-only) reshapes of the NCHW tensor — no transpose, no pad.
    x = inputs_nchw.reshape(N, C, HW)
    t = targets_nhw.reshape(N, 1, HW)
    if not jnp.issubdtype(t.dtype, jnp.integer):
        t = t.astype(jnp.int32)

    if tp is None:
        # VMEM bytes per lane of tp, including the sublane padding each block
        # really gets on TPU:
        #   logits (C, tp):  C padded to 8 (4B) / 16 (2B) / 32 (1B) sublanes
        #   targets (1, tp): 1 row padded likewise -> 32 B/lane regardless
        #   acc     (2, tp): f32, padded to 8 rows -> 32 B/lane (resident)
        # Inputs are double-buffered; ~3 logits-sized f32 temporaries are live
        # in the kernel body.
        def padded_bpl(rows, itemsize):
            sub = {4: 8, 2: 16, 1: 32}.get(itemsize, 8)
            return -(-rows // sub) * sub * itemsize

        x_bpl = padded_bpl(C, jnp.dtype(x.dtype).itemsize)
        t_bpl = padded_bpl(1, jnp.dtype(t.dtype).itemsize)
        o_bpl = padded_bpl(2, 4)
        tmp_bpl = 3 * max(padded_bpl(C, 4), 32)
        per_lane = 2 * (x_bpl + t_bpl) + 2 * o_bpl + tmp_bpl
        budget_bytes = 12 * 1024 * 1024   # headroom under the 32 MiB limit
        cap = max(128, min(65536, (budget_bytes // per_lane) // 128 * 128))
        if HW <= cap:
            tp = HW                       # block == full lane extent (allowed)
        else:
            # Balanced split: avoid an almost-entirely-masked last tile.
            n_tiles = pl.cdiv(HW, cap)
            tp = min(cap, pl.cdiv(pl.cdiv(HW, n_tiles), 128) * 128)
    num_p = pl.cdiv(HW, tp)

    if n_chunks is None:
        # Second "parallel" grid axis so both v7x TensorCores have work when
        # the batch axis alone cannot feed them; a no-cost serial loop on
        # single-TensorCore chips.
        n_chunks = 2 if (N < 2 and num_p >= 2) else 1
    n_inner = pl.cdiv(num_p, n_chunks)
    ragged = (n_chunks * n_inner * tp) != HW

    kernel = functools.partial(_focal_ce_kernel, ignore_index=num_classes,
                               hw=HW, tp=tp, n_inner=n_inner, ragged=ragged)

    last_block = num_p - 1

    def in_map(n, ch, p):
        # Clamp so a fully out-of-bounds tile (possible when num_p is not a
        # multiple of n_chunks) re-reads the last real block; the in-kernel
        # bounds mask zeroes its contribution.
        return (n, 0, jnp.minimum(ch * n_inner + p, last_block))

    acc = pl.pallas_call(
        kernel,
        out_shape=jax.ShapeDtypeStruct((N, n_chunks, 2, tp), jnp.float32),
        grid_spec=pltpu.PrefetchScalarGridSpec(
            num_scalar_prefetch=0,
            grid=(N, n_chunks, n_inner),
            in_specs=[
                pl.BlockSpec((None, C, tp), in_map),
                pl.BlockSpec((None, 1, tp), in_map),
            ],
            out_specs=pl.BlockSpec((None, None, 2, tp),
                                   lambda n, ch, p: (n, ch, 0, 0)),
        ),
        compiler_params=pltpu.CompilerParams(
            dimension_semantics=("parallel", "parallel", "arbitrary"),
            vmem_limit_bytes=32 * 1024 * 1024),
    )(x, t)

    # Tiny epilogue in JAX: merge per-(n, chunk, lane) partials, then apply the
    # focal transform to the scalar mean CE.
    total_sum = jnp.sum(acc[:, :, 0, :])
    # Per-lane counts are small exact integers stored in f32; sum them in int32
    # so the count stays exact even for very large N*H*W.
    total_cnt = jnp.sum(acc[:, :, 1, :].astype(jnp.int32))
    # Note: if every pixel is ignore_index this is NaN/Inf — same as PyTorch's
    # mean over an empty set of non-ignored pixels.
    logpt = total_sum / total_cnt.astype(jnp.float32)
    pt = jnp.exp(-logpt)
    return (1.0 - pt) ** gamma * logpt


def _focal_loss_ref(inputs_nchw, targets_nhw, *, num_classes, gamma=2.0):
    """Pure-JAX reference with the same (executed) PyTorch semantics."""
    N, C, H, W = inputs_nchw.shape
    logits = jnp.transpose(inputs_nchw, (0, 2, 3, 1)).reshape(-1, C)
    logits = logits.astype(jnp.float32)
    t = targets_nhw.reshape(-1).astype(jnp.int32)
    lse = jax.nn.logsumexp(logits, axis=-1)
    safe_t = jnp.where(t == num_classes, 0, t)
    tgt_logit = jnp.take_along_axis(logits, safe_t[:, None], axis=-1)[:, 0]
    ce = lse - tgt_logit
    valid = t != num_classes
    logpt = jnp.sum(jnp.where(valid, ce, 0.0)) / jnp.sum(valid)
    pt = jnp.exp(-logpt)
    return (1.0 - pt) ** gamma * logpt


if __name__ == "__main__":
    num_classes = 4
    gamma = 2.0
    key = jax.random.PRNGKey(0)
    k1, k2, k3, k4, k5, k6 = jax.random.split(key, 6)

    # Check 1: N=2, C=4, H=W=16 (single full-width pixel tile).
    N, C, H, W = 2, num_classes, 16, 16
    inputs = jax.random.normal(k1, (N, C, H, W), dtype=jnp.float32)
    targets = jax.random.randint(k2, (N, H, W), 0, num_classes + 1,
                                 dtype=jnp.int32)
    out = jax.block_until_ready(
        focal_loss(inputs, targets, num_classes=num_classes, gamma=gamma,
                   reduction='mean'))
    ref = _focal_loss_ref(inputs, targets, num_classes=num_classes,
                          gamma=gamma)
    assert jnp.allclose(out, ref, rtol=1e-5, atol=1e-5), (out, ref)

    # Check 2: HW=288 (not a multiple of 128) handled as one full-extent tile.
    N2, H2, W2 = 2, 16, 18
    inputs2 = jax.random.normal(k3, (N2, C, H2, W2), dtype=jnp.float32)
    targets2 = jax.random.randint(k4, (N2, H2, W2), 0, num_classes + 1,
                                  dtype=jnp.int32)
    out2 = jax.block_until_ready(
        focal_loss(inputs2, targets2, num_classes=num_classes, gamma=gamma))
    ref2 = _focal_loss_ref(inputs2, targets2, num_classes=num_classes,
                           gamma=gamma)
    assert jnp.allclose(out2, ref2, rtol=1e-5, atol=1e-5), (out2, ref2)

    # Check 3: N=1 with a forced-small tile — exercises the chunked grid
    # (both "parallel" axes), the gated ragged / fully-out-of-bounds mask
    # path, bf16 logits pass-through and narrow (int8) targets.
    N3, H3, W3 = 1, 16, 18
    inputs3 = jax.random.normal(k5, (N3, C, H3, W3),
                                dtype=jnp.float32).astype(jnp.bfloat16)
    targets3 = jax.random.randint(k6, (N3, H3, W3), 0, num_classes + 1,
                                  dtype=jnp.int32).astype(jnp.int8)
    out3 = jax.block_until_ready(
        focal_loss(inputs3, targets3, num_classes=num_classes, gamma=gamma,
                   tp=128))
    ref3 = _focal_loss_ref(inputs3, targets3, num_classes=num_classes,
                           gamma=gamma)
    assert jnp.allclose(out3, ref3, rtol=1e-4, atol=1e-4), (out3, ref3)

    print("KERNEL_OK")
</pallas_src>

<mosaic_0001>
module attributes {stable_mosaic.version = 11 : i64} {
  func.func @_focal_ce_kernel(%arg0: i32, %arg1: i32, %arg2: i32, %arg3: memref<1x4x256xf32, #tpu.memory_space<vmem>>, %arg4: memref<1x1x256xi32, #tpu.memory_space<vmem>>, %arg5: memref<1x1x2x256xf32, #tpu.memory_space<vmem>>) attributes {dimension_semantics = [#tpu.dimension_semantics<parallel>, #tpu.dimension_semantics<parallel>, #tpu.dimension_semantics<arbitrary>], iteration_bounds = array<i64: 2, 1, 1>, scalar_prefetch = 0 : i64, scratch_operands = 0 : i64, tpu.core_type = #tpu.core_type<tc>, window_params = [{transform_indices = @transform_0, window_bounds = array<i64: 1, 4, 256>}, {transform_indices = @transform_1, window_bounds = array<i64: 1, 1, 256>}, {transform_indices = @transform_2, window_bounds = array<i64: 1, 1, 2, 256>}]} {
    %c0_i32 = arith.constant 0 : i32
    %0 = arith.cmpi eq, %arg2, %c0_i32 : i32
    %1 = arith.extui %0 : i1 to i32
    %c0_i32_0 = arith.constant 0 : i32
    %2 = arith.cmpi ne, %1, %c0_i32_0 : i32
    scf.if %2 {
      %cst_18 = arith.constant 0.000000e+00 : f32
      %36 = vector.broadcast %cst_18 : f32 to vector<2x256xf32>
      %c0_19 = arith.constant 0 : index
      %c0_20 = arith.constant 0 : index
      %c0_21 = arith.constant 0 : index
      %c0_22 = arith.constant 0 : index
      %37 = vector.load %arg5[%c0_19, %c0_20, %c0_21, %c0_22] : memref<1x1x2x256xf32, #tpu.memory_space<vmem>>, vector<1x1x2x256xf32>
      %38 = vector.shape_cast %37 : vector<1x1x2x256xf32> to vector<2x256xf32>
      %39 = vector.shape_cast %36 : vector<2x256xf32> to vector<1x1x2x256xf32>
      tpu.vector_store %arg5[%c0_19, %c0_20, %c0_21, %c0_22], %39 {strides = array<i32>} : memref<1x1x2x256xf32, #tpu.memory_space<vmem>>, vector<1x1x2x256xf32>,
    } else {
    }
    %c0 = arith.constant 0 : index
    %c0_1 = arith.constant 0 : index
    %c0_2 = arith.constant 0 : index
    %3 = vector.load %arg3[%c0, %c0_1, %c0_2] : memref<1x4x256xf32, #tpu.memory_space<vmem>>, vector<1x4x256xf32>
    %4 = vector.shape_cast %3 : vector<1x4x256xf32> to vector<4x256xf32>
    %c0_3 = arith.constant 0 : index
    %c0_4 = arith.constant 0 : index
    %c0_5 = arith.constant 0 : index
    %5 = vector.load %arg4[%c0_3, %c0_4, %c0_5] : memref<1x1x256xi32, #tpu.memory_space<vmem>>, vector<1x1x256xi32>
    %6 = vector.shape_cast %5 : vector<1x1x256xi32> to vector<1x256xi32>
    %cst = arith.constant dense<0xFF800000> : vector<256xf32>
    %7 = vector.multi_reduction <maximumf>, %4, %cst [0] : vector<4x256xf32> to vector<256xf32>
    %8 = vector.shape_cast %7 : vector<256xf32> to vector<1x256xf32>
    %9 = vector.broadcast %8 : vector<1x256xf32> to vector<4x256xf32>
    %10 = arith.subf %4, %9 : vector<4x256xf32>
    %11 = math.exp %10 : vector<4x256xf32>
    %cst_6 = arith.constant dense<0.000000e+00> : vector<256xf32>
    %12 = vector.multi_reduction <add>, %11, %cst_6 [0] : vector<4x256xf32> to vector<256xf32>
    %13 = vector.shape_cast %12 : vector<256xf32> to vector<1x256xf32>
    %14 = tpu.iota {dimensions = array<i32: 0>} : vector<4x256xi32>
    %15 = vector.broadcast %6 : vector<1x256xi32> to vector<4x256xi32>
    %16 = arith.cmpi eq, %14, %15 : vector<4x256xi32>
    %cst_7 = arith.constant 0.000000e+00 : f32
    %17 = vector.broadcast %cst_7 : f32 to vector<4x256xf32>
    %18 = arith.select %16, %10, %17 : vector<4x256xi1>, vector<4x256xf32>
    %cst_8 = arith.constant dense<0.000000e+00> : vector<256xf32>
    %19 = vector.multi_reduction <add>, %18, %cst_8 [0] : vector<4x256xf32> to vector<256xf32>
    %20 = vector.shape_cast %19 : vector<256xf32> to vector<1x256xf32>
    %21 = math.log %13 : vector<1x256xf32>
    %22 = arith.subf %21, %20 : vector<1x256xf32>
    %c4_i32 = arith.constant 4 : i32
    %23 = vector.broadcast %c4_i32 : i32 to vector<1x256xi32>
    %24 = arith.cmpi ne, %6, %23 : vector<1x256xi32>
    %cst_9 = arith.constant 0.000000e+00 : f32
    %25 = vector.broadcast %cst_9 : f32 to vector<1x256xf32>
    %26 = arith.select %24, %22, %25 : vector<1x256xi1>, vector<1x256xf32>
    %27 = arith.extui %24 : vector<1x256xi1> to vector<1x256xi32>
    %28 = arith.sitofp %27 : vector<1x256xi32> to vector<1x256xf32>
    %29 = tpu.concatenate %26, %28 in 0 : vector<1x256xf32>, vector<1x256xf32> -> vector<2x256xf32>
    %c0_10 = arith.constant 0 : index
    %c0_11 = arith.constant 0 : index
    %c0_12 = arith.constant 0 : index
    %c0_13 = arith.constant 0 : index
    %30 = vector.load %arg5[%c0_10, %c0_11, %c0_12, %c0_13] : memref<1x1x2x256xf32, #tpu.memory_space<vmem>>, vector<1x1x2x256xf32>
    %31 = vector.shape_cast %30 : vector<1x1x2x256xf32> to vector<2x256xf32>
    %32 = arith.addf %31, %29 : vector<2x256xf32>
    %c0_14 = arith.constant 0 : index
    %c0_15 = arith.constant 0 : index
    %c0_16 = arith.constant 0 : index
    %c0_17 = arith.constant 0 : index
    %33 = vector.load %arg5[%c0_14, %c0_15, %c0_16, %c0_17] : memref<1x1x2x256xf32, #tpu.memory_space<vmem>>, vector<1x1x2x256xf32>
    %34 = vector.shape_cast %33 : vector<1x1x2x256xf32> to vector<2x256xf32>
    %35 = vector.shape_cast %32 : vector<2x256xf32> to vector<1x1x2x256xf32>
    tpu.vector_store %arg5[%c0_14, %c0_15, %c0_16, %c0_17], %35 {strides = array<i32>} : memref<1x1x2x256xf32, #tpu.memory_space<vmem>>, vector<1x1x2x256xf32>,
    return
  }
  func.func @transform_0(%arg0: i32, %arg1: i32, %arg2: i32) -> (i32, i32, i32) {
    %c1_i32 = arith.constant 1 : i32
    %0 = arith.muli %arg1, %c1_i32 : i32
    %1 = arith.addi %0, %arg2 : i32
    %c0_i32 = arith.constant 0 : i32
    %2 = arith.minsi %1, %c0_i32 : i32
    %c0_i32_0 = arith.constant 0 : i32
    %c0_i32_1 = arith.constant 0 : i32
    return %arg0, %c0_i32_0, %2 : i32, i32, i32
  }
  func.func @transform_1(%arg0: i32, %arg1: i32, %arg2: i32) -> (i32, i32, i32) {
    %c1_i32 = arith.constant 1 : i32
    %0 = arith.muli %arg1, %c1_i32 : i32
    %1 = arith.addi %0, %arg2 : i32
    %c0_i32 = arith.constant 0 : i32
    %2 = arith.minsi %1, %c0_i32 : i32
    %c0_i32_0 = arith.constant 0 : i32
    %c0_i32_1 = arith.constant 0 : i32
    return %arg0, %c0_i32_0, %2 : i32, i32, i32
  }
  func.func @transform_2(%arg0: i32, %arg1: i32, %arg2: i32) -> (i32, i32, i32, i32) {
    %c0_i32 = arith.constant 0 : i32
    %c0_i32_0 = arith.constant 0 : i32
    %c0_i32_1 = arith.constant 0 : i32
    return %arg0, %arg1, %c0_i32, %c0_i32_0 : i32, i32, i32, i32
  }
}

</mosaic_0001>

<llo_original>
// kernel: tpu_custom_call.1
$region0: #{tpu_custom_call.1}
  #allocation0 [shape = 'u32[]', space=smem, size = 0x4, offset = 0x4, fixed_abs, tag = 'smem constant byte address 0x4 - core index']
  #allocation1 [shape = 'u32[72,128]{1,0:T(1,128)}', space=vmem, size = 0x9000, scoped, tag = 'internal scratch']
  %s0 = inlined_call_operand.hbm [shape: f32[2,4,256], index: 0, kind: input, shape index: {}]
  %s1 = inlined_call_operand.hbm [shape: s32[2,1,256], index: 1, kind: input, shape index: {}]
  %s2 = inlined_call_operand.hbm [shape: f32[2,1,2,256], index: 2, kind: output, shape index: {}]
  %s3 = sld [smem:[#allocation0]]
  $region53: #{tpu_custom_call.1} parent=0
    _
  %s5 = ssub.s32 1, %s3
  %s6 = scalar_select 0, %s5, %s3
  $region1: #{tpu_custom_call.1} parent=0
    #allocation2 [shape = 'u8[8192]{0}', space=vmem, size = 0x2000, scoped, tag = 'input window, operand 0']
    #allocation3 [shape = 's32[2]{0}', space=sflag, size = 0x8, scoped, tag = 'scoped memory for tpu_custom_call.1']
    #allocation4 [shape = 's32[2]{0}', space=sflag, size = 0x8, scoped, tag = 'scoped memory for tpu_custom_call.1']
    #allocation5 [shape = 'u8[2048]{0}', space=vmem, size = 0x800, scoped, tag = 'input window, operand 1']
    #allocation6 [shape = 's32[2]{0}', space=sflag, size = 0x8, scoped, tag = 'scoped memory for tpu_custom_call.1']
    #allocation7 [shape = 'u8[4096]{0}', space=vmem, size = 0x1000, scoped, tag = 'output window, operand 0']
    %7 = vsyncpa [#allocation3], 0
    %s8 = scalar_lea.sflag [#allocation3], 1
    %9 = vsyncpa %s8, 0
    %10 = vsyncpa [#allocation6], 0
    %s11 = scalar_lea.sflag [#allocation6], 1
    %12 = vsyncpa %s11, 0
    %13 = vsyncpa [#allocation4], 0
    %s14 = scalar_lea.sflag [#allocation4], 1
    %15 = vsyncpa %s14, 0
    loop: start=0, step=1, limit=4
    $region2: #{tpu_custom_call.1} parent=1 // loop_pre_header
      _
    $region3: #{tpu_custom_call.1} parent=1 // loop_header
      %s17 = sphi 0, %s21
      %p18 = scmp.ge.s32.totalorder %s17, 4
      %s24 = sphi 0, %s43
      %s25 = sphi 0, %s39
      %s26 = sphi 0, %s35
      %s27 = sphi 0, %s24
      %s28 = sphi 0, %s25
      %s29 = sphi 0, %s26
      %s30 = sphi 0, %s27
      %s31 = sphi 0, %s28
      %s32 = sphi 0, %s29
      %s54 = sphi 0, %s56
      %s57 = sphi 0, %s54
      %s58 = sphi 0, %s57
      %s74 = sphi 0, %s58
      %s88 = sphi 0, %s90
      %s91 = sphi 0, %s88
      %s92 = sphi 0, %s91
      %s108 = sphi 0, %s92
      %s116 = sphi 0, %s118
      %s119 = sphi 0, %s116
      %s120 = sphi 0, %s119
      %s136 = sphi 0, %s120
    $region4: #{tpu_custom_call.1} parent=1 // loop_header_branch
      %20 = sbr.rel (%p18) target = $region8
    $region5: #{tpu_custom_call.1} parent=1 // loop_body
      %s22 = ssub.s32 %s17, 1
      %s23 = ssub.s32 %s17, 2
      %s33 = sadd.s32 1, %s26
      %p34 = scmp.ge.s32.totalorder %s33, 1
      %s35 = scalar_select %p34, 0, %s33
      %s36 = sadd.s32 1, %s25
      %s37 = scalar_select %p34, %s36, %s25
      %p38 = scmp.ge.s32.totalorder %s37, 1
      %s39 = scalar_select %p38, 0, %s37
      %s40 = sadd.s32 1, %s24
      %s41 = scalar_select %p38, %s40, %s24
      %p42 = scmp.ge.s32.totalorder %s41, 2
      %s43 = scalar_select %p42, 0, %s41
      %s44 = sadd.s32 %s25, %s26
      %p45 = scmp.lt.s32.totalorder %s44, 0
      %s46 = scalar_select %p45, %s44, 0
      %s47 = sadd.s32 %s39, %s35
      %p48 = scmp.lt.s32.totalorder %s47, 0
      %s49 = scalar_select %p48, %s47, 0
      %s50 = ssub.s32 %s24, %s43
      %s51 = ssub.s32 %s46, %s49
      %s52 = sor.u32 %s50, %s51
      %p53 = scmp.eq.s32.totalorder %s52, 0
      %s55 = sadd.s32 %s54, 1
      %s56 = scalar_select %p53, %s54, %s55
      %p59 = pneg %p53
      %p60 = scmp.eq.s32.totalorder %s17, 1
      %p61 = por %p59, %p60
      %p62 = scmp.ne.s32.totalorder %s54, %s57
      %p63 = scmp.eq.s32.totalorder %s17, 0
      %p64 = por %p62, %p63
      %p65 = scmp.ne.s32.totalorder %s54, %s57
      %p66 = scmp.eq.s32.totalorder %s22, 1
      %p67 = por %p65, %p66
      %p68 = scmp.ne.s32.totalorder %s57, %s58
      %p69 = scmp.eq.s32.totalorder %s22, 0
      %p70 = por %p68, %p69
      %p71 = scmp.ne.s32.totalorder %s57, %s58
      %p72 = scmp.eq.s32.totalorder %s23, 1
      %p73 = por %p71, %p72
      %p75 = scmp.ne.s32.totalorder %s58, %s74
      %p76 = scmp.eq.s32.totalorder %s23, 0
      %p77 = por %p75, %p76
      %s78 = sadd.s32 %s25, %s26
      %p79 = scmp.lt.s32.totalorder %s78, 0
      %s80 = scalar_select %p79, %s78, 0
      %s81 = sadd.s32 %s39, %s35
      %p82 = scmp.lt.s32.totalorder %s81, 0
      %s83 = scalar_select %p82, %s81, 0
      %s84 = ssub.s32 %s24, %s43
      %s85 = ssub.s32 %s80, %s83
      %s86 = sor.u32 %s84, %s85
      %p87 = scmp.eq.s32.totalorder %s86, 0
      %s89 = sadd.s32 %s88, 1
      %s90 = scalar_select %p87, %s88, %s89
      %p93 = pneg %p87
      %p94 = scmp.eq.s32.totalorder %s17, 1
      %p95 = por %p93, %p94
      %p96 = scmp.ne.s32.totalorder %s88, %s91
      %p97 = scmp.eq.s32.totalorder %s17, 0
      %p98 = por %p96, %p97
      %p99 = scmp.ne.s32.totalorder %s88, %s91
      %p100 = scmp.eq.s32.totalorder %s22, 1
      %p101 = por %p99, %p100
      %p102 = scmp.ne.s32.totalorder %s91, %s92
      %p103 = scmp.eq.s32.totalorder %s22, 0
      %p104 = por %p102, %p103
      %p105 = scmp.ne.s32.totalorder %s91, %s92
      %p106 = scmp.eq.s32.totalorder %s23, 1
      %p107 = por %p105, %p106
      %p109 = scmp.ne.s32.totalorder %s92, %s108
      %p110 = scmp.eq.s32.totalorder %s23, 0
      %p111 = por %p109, %p110
      %s112 = ssub.s32 %s24, %s43
      %s113 = ssub.s32 %s25, %s39
      %s114 = sor.u32 %s112, %s113
      %p115 = scmp.eq.s32.totalorder %s114, 0
      %s117 = sadd.s32 %s116, 1
      %s118 = scalar_select %p115, %s116, %s117
      %p121 = pneg %p115
      %p122 = scmp.eq.s32.totalorder %s17, 1
      %p123 = por %p121, %p122
      %p124 = scmp.ne.s32.totalorder %s116, %s119
      %p125 = scmp.eq.s32.totalorder %s17, 0
      %p126 = por %p124, %p125
      %p127 = scmp.ne.s32.totalorder %s116, %s119
      %p128 = scmp.eq.s32.totalorder %s22, 1
      %p129 = por %p127, %p128
      %p130 = scmp.ne.s32.totalorder %s119, %s120
      %p131 = scmp.eq.s32.totalorder %s22, 0
      %p132 = por %p130, %p131
      %p133 = scmp.ne.s32.totalorder %s119, %s120
      %p134 = scmp.eq.s32.totalorder %s23, 1
      %p135 = por %p133, %p134
      %p137 = scmp.ne.s32.totalorder %s120, %s136
      %p138 = scmp.eq.s32.totalorder %s23, 0
      %p139 = por %p137, %p138
      %p140 = scmp.le.s32.totalorder 1, %s17
      %p141 = scmp.lt.s32.totalorder %s17, 3
      %p142 = pnand %p140, %p141
      %p143 = pneg %p142
      // Predicated region
      $region9: #{tpu_custom_call.1} parent=5 // pred_check
        _
      $region10: #{tpu_custom_call.1} parent=5 // pred_check_branch
        %145 = sbr.rel (%p142) target = $region12
      $region11: #{tpu_custom_call.1} parent=5 // pred_region
        %s146 = ssub.s32 %s17, 1
      $region12: #{tpu_custom_call.1} parent=5 // pred_fallthru
        _
      %p147 = scmp.lt.s32.totalorder %s17, 2
      // Predicated region
      $region13: #{tpu_custom_call.1} parent=5 // pred_check
        %p148 = pneg %p147
      $region14: #{tpu_custom_call.1} parent=5 // pred_check_branch
        %150 = sbr.rel (%p148) target = $region16
      $region15: #{tpu_custom_call.1} parent=5 // pred_region
        // Predicated region
        $region17: #{tpu_custom_call.1} parent=15 // pred_check
          %p151 = pneg %p64
        $region18: #{tpu_custom_call.1} parent=15 // pred_check_branch
          %153 = sbr.rel (%p151) target = $region20
        $region19: #{tpu_custom_call.1} parent=15 // pred_region
          %s154 = sand.u32 %s54, 1
          %s155 = scalar_lea.sflag [#allocation3], %s154
          %s156 = sand.u32 %s54, 1
          %s157 = smul.addr %s156, 8
          %s158 = scalar_lea.vmem [#allocation2], %s157
          %s159 = sadd.s32 %s25, %s26
          %p160 = scmp.lt.s32.totalorder %s159, 0
          %s161 = scalar_select %p160, %s159, 0
          %s162 = smul.u32 2, %s161
          %164 = vsyncadd %s155, 0
          %s165 = smul.addr %s24, 2
          %s166 = sadd.s32 %s162, %s165
          %s167 = smul.addr %s166, 4
          %s168 = scalar_lea.hbm %s0, %s167
          %s170 = sshll.u32 %s168, 4
          %s171 = int_to_ptr.hbm [resolvable:$true] %s170
          %s172 = sshll.u32 %s158, 4
          %s173 = int_to_ptr.vmem [resolvable:$true] %s172
          %175 = dma.hbm_to_vmem [thread:$0]  %s171, 128, %s173, %s155
        $region20: #{tpu_custom_call.1} parent=15 // pred_fallthru
          _
        // Predicated region
        $region21: #{tpu_custom_call.1} parent=15 // pred_check
          %p176 = pneg %p98
        $region22: #{tpu_custom_call.1} parent=15 // pred_check_branch
          %178 = sbr.rel (%p176) target = $region24
        $region23: #{tpu_custom_call.1} parent=15 // pred_region
          %s179 = sand.u32 %s88, 1
          %s180 = scalar_lea.sflag [#allocation6], %s179
          %s181 = sand.u32 %s88, 1
          %s182 = smul.addr %s181, 2
          %s183 = scalar_lea.vmem [#allocation5], %s182
          %s184 = sadd.s32 %s25, %s26
          %p185 = scmp.lt.s32.totalorder %s184, 0
          %s186 = scalar_select %p185, %s184, 0
          %s187 = smul.u32 2, %s186
          %189 = vsyncadd %s180, 0
          %s190 = smul.addr %s24, 2
          %s191 = sadd.s32 %s187, %s190
          %s192 = scalar_lea.hbm %s1, %s191
          %s194 = sshll.u32 %s192, 4
          %s195 = int_to_ptr.hbm [resolvable:$true] %s194
          %s196 = sshll.u32 %s183, 4
          %s197 = int_to_ptr.vmem [resolvable:$true] %s196
          %199 = dma.hbm_to_vmem [thread:$0]  %s195, 32, %s197, %s180
        $region24: #{tpu_custom_call.1} parent=15 // pred_fallthru
          _
      $region16: #{tpu_custom_call.1} parent=5 // pred_fallthru
        _
      %p200 = scmp.le.s32.totalorder 1, %s17
      %p201 = scmp.lt.s32.totalorder %s17, 3
      %p202 = pnand %p200, %p201
      %p203 = pneg %p202
      // Predicated region
      $region25: #{tpu_custom_call.1} parent=5 // pred_check
        _
      $region26: #{tpu_custom_call.1} parent=5 // pred_check_branch
        %205 = sbr.rel (%p202) target = $region28
      $region27: #{tpu_custom_call.1} parent=5 // pred_region
        %s206 = ssub.s32 %s17, 1
        %s207 = sand.u32 %s57, 1
        %s208 = scalar_lea.sflag [#allocation3], %s207
        %s209 = sand.u32 %s57, 1
        %s210 = smul.addr %s209, 8
        %s211 = scalar_lea.vmem [#allocation2], %s210
        // Predicated region
        $region29: #{tpu_custom_call.1} parent=27 // pred_check
          %p212 = pneg %p70
        $region30: #{tpu_custom_call.1} parent=27 // pred_check_branch
          %214 = sbr.rel (%p212) target = $region32
        $region31: #{tpu_custom_call.1} parent=27 // pred_region
          %216 = dma.done %s208, 128
        $region32: #{tpu_custom_call.1} parent=27 // pred_fallthru
          _
        %s217 = sand.u32 %s91, 1
        %s218 = scalar_lea.sflag [#allocation6], %s217
        %s219 = sand.u32 %s91, 1
        %s220 = smul.addr %s219, 2
        %s221 = scalar_lea.vmem [#allocation5], %s220
        // Predicated region
        $region33: #{tpu_custom_call.1} parent=27 // pred_check
          %p222 = pneg %p104
        $region34: #{tpu_custom_call.1} parent=27 // pred_check_branch
          %224 = sbr.rel (%p222) target = $region36
        $region35: #{tpu_custom_call.1} parent=27 // pred_region
          %226 = dma.done %s218, 32
        $region36: #{tpu_custom_call.1} parent=27 // pred_fallthru
          _
        %s227 = sand.u32 %s57, 1
        %s228 = scalar_lea.sflag [#allocation3], %s227
        %s229 = sand.u32 %s57, 1
        %s230 = smul.addr %s229, 8
        %s231 = scalar_lea.vmem [#allocation2], %s230
        %p232 = pneg %p70
        %p233 = pneg %p67
        %s234 = sand.u32 %s91, 1
        %s235 = scalar_lea.sflag [#allocation6], %s234
        %s236 = sand.u32 %s91, 1
        %s237 = smul.addr %s236, 2
        %s238 = scalar_lea.vmem [#allocation5], %s237
        %p239 = pneg %p104
        %p240 = pneg %p101
        %p241 = pneg %p132
        %p242 = pneg %p129
        %s243 = sand.u32 %s119, 1
        %s244 = scalar_lea.sflag [#allocation4], %s243
        %s245 = sand.u32 %s119, 1
        %s246 = smul.addr %s245, 4
        %s247 = scalar_lea.vmem [#allocation7], %s246
        %s248 = sadd.s32 %s28, %s29
        %p249 = scmp.lt.s32.totalorder %s248, 0
        %s250 = scalar_select %p249, %s248, 0
        %s251 = smul.u32 2, %s250
        %s252 = sadd.s32 %s28, %s29
        %p253 = scmp.lt.s32.totalorder %s252, 0
        %s254 = scalar_select %p253, %s252, 0
        %s255 = smul.u32 2, %s254
        %p256 = scmp.eq.s32.totalorder %s29, 0
        // Predicated region
        $region37: #{tpu_custom_call.1} parent=27 // pred_check
          %p257 = pneg %p256
        $region38: #{tpu_custom_call.1} parent=27 // pred_check_branch
          %259 = sbr.rel (%p257) target = $region40
        $region39: #{tpu_custom_call.1} parent=27 // pred_region
          %260 = vst [vmem:[%s247] sm:$0xf] 0.0
        $region40: #{tpu_custom_call.1} parent=27 // pred_fallthru
          _
        %v261 = vld [vmem:[%s211] sm:$0xff]
        %v262 = vld [vmem:[%s221] sm:$0x3]
        %264 = vst [vmem:[#allocation1] ss:$2 sm:$0xff] %v261
        %v265 = vld.sshfl [vmem:[#allocation1] sm:$0xff pattern:$0x75316420]
        %v266 = vld.sshfl [vmem:[#allocation1 + $0x8] sm:$0xff pattern:$0x75316420]
        %vm269 = vcmask 1043456
        %v270 = vsel %vm269, %v265, -inf
        %v271 = vrot.slane %v270, 4
        %v272 = vmax.f32 %v270, %v271
        %v273 = vrot.slane %v272, 2
        %v274 = vmax.f32 %v272, %v273
        %v275 = vrot.slane %v274, 1
        %v276 = vmax.f32 %v274, %v275
        %v277 = vsel %vm269, %v266, -inf
        %v278 = vrot.slane %v277, 4
        %v279 = vmax.f32 %v277, %v278
        %v280 = vrot.slane %v279, 2
        %v281 = vmax.f32 %v279, %v280
        %v282 = vrot.slane %v281, 1
        %v283 = vmax.f32 %v281, %v282
        %v286 = vrot.slane %v283, 4
        %v287 = vsel %vm269, %v276, %v286
        %v289 = vsub.f32 %v261, %v287
        %v290 = vmul.f32 %v289, 1.442695
        %v291 = vpow.pop %v290
        %293 = vst [vmem:[#allocation1] ss:$2 sm:$0xff] %v291
        %v294 = vld.sshfl [vmem:[#allocation1] sm:$0xff pattern:$0x75316420]
        %v295 = vld.sshfl [vmem:[#allocation1 + $0x8] sm:$0xff pattern:$0x75316420]
        %v298 = vsel %vm269, %v294, 0.0
        %v299 = vrot.slane %v298, 4
        %v300 = vadd.f32 %v298, %v299
        %v301 = vrot.slane %v300, 2
        %v302 = vadd.f32 %v300, %v301
        %v303 = vrot.slane %v302, 1
        %v304 = vadd.f32 %v302, %v303
        %v305 = vsel %vm269, %v295, 0.0
        %v306 = vrot.slane %v305, 4
        %v307 = vadd.f32 %v305, %v306
        %v308 = vrot.slane %v307, 2
        %v309 = vadd.f32 %v307, %v308
        %v310 = vrot.slane %v309, 1
        %v311 = vadd.f32 %v309, %v310
        %v312 = vlaneseq
        %v313 = vshrl.u32 %v312, 7
        %v314 = vperm.slane %v262, 0
        %v315 = vperm.slane %v262, 1
        %vm316 = vcmp.eq.s32.totalorder %v313, %v314
        %vm317 = vcmp.eq.s32.totalorder %v313, %v315
        %319 = vst [vmem:[#allocation1] ss:$2 sm:$0xff] %v289
        %v320 = vld.sshfl [vmem:[#allocation1] sm:$0xff pattern:$0x75316420]
        %v321 = vld.sshfl [vmem:[#allocation1 + $0x8] sm:$0xff pattern:$0x75316420]
        %v324 = vsel %vm316, %v320, 0.0
        %v325 = vsel %vm317, %v321, 0.0
        %v326 = vsel %vm269, %v324, 0.0
        %v327 = vrot.slane %v326, 4
        %v328 = vadd.f32 %v326, %v327
        %v329 = vrot.slane %v328, 2
        %v330 = vadd.f32 %v328, %v329
        %v331 = vrot.slane %v330, 1
        %v332 = vadd.f32 %v330, %v331
        %v333 = vsel %vm269, %v325, 0.0
        %v334 = vrot.slane %v333, 4
        %v335 = vadd.f32 %v333, %v334
        %v336 = vrot.slane %v335, 2
        %v337 = vadd.f32 %v335, %v336
        %v338 = vrot.slane %v337, 1
        %v339 = vadd.f32 %v337, %v338
        %v340 = vlog2.pop %v304
        %v341 = vmul.f32 %v340, 0.6931472
        %v342 = vlog2.pop %v311
        %v343 = vmul.f32 %v342, 0.6931472
        %v344 = vsub.f32 %v341, %v332
        %v345 = vsub.f32 %v343, %v339
        %vm346 = vcmp.ne.s32.totalorder %v262, 4
        %v349 = vrot.slane %v345, 7
        %vm350 = vcmask 1040384
        %v351 = vsel %vm350, %v344, %v349
        %v353 = vsel %vm346, %v351, 0.0
        %v354 = vsel %vm346, 1, 0
        %v355 = vcvt.s32.f32 %v354
        %v357 = vperm.slane %v353, 0
        %v358 = vperm.slane %v353, 1
        %v362 = vperm.slane %v355, 0
        %v363 = vperm.slane %v355, 1
        %v366 = vsel %vm350, %v357, %v362
        %v367 = vsel %vm350, %v358, %v363
        %v368 = vld [vmem:[%s247] sm:$0xf]
        %v371 = vrot.slane %v367, 6
        %vm372 = vcmask 1041408
        %v373 = vsel %vm372, %v366, %v371
        %v375 = vadd.f32 %v368, %v373
        %376 = vst [vmem:[%s247] sm:$0xf] %v375
        %s377 = sand.u32 %s119, 1
        %s378 = scalar_lea.sflag [#allocation4], %s377
        %s379 = sand.u32 %s119, 1
        %s380 = smul.addr %s379, 4
        %s381 = scalar_lea.vmem [#allocation7], %s380
        // Predicated region
        $region41: #{tpu_custom_call.1} parent=27 // pred_check
          %p382 = pneg %p129
        $region42: #{tpu_custom_call.1} parent=27 // pred_check_branch
          %384 = sbr.rel (%p382) target = $region44
        $region43: #{tpu_custom_call.1} parent=27 // pred_region
          %386 = vsyncadd %s378, 0
          %s387 = smul.addr %s28, 2
          %s388 = smul.addr %s27, 2
          %s389 = sadd.s32 %s387, %s388
          %s390 = smul.addr %s389, 2
          %s391 = scalar_lea.hbm %s2, %s390
          %s393 = sshll.u32 %s381, 4
          %s394 = int_to_ptr.vmem [resolvable:$true] %s393
          %s395 = sshll.u32 %s391, 4
          %s396 = int_to_ptr.hbm [resolvable:$true] %s395
          %398 = dma.vmem_to_hbm [thread:$0]  %s394, 64, %s396, %s378
        $region44: #{tpu_custom_call.1} parent=27 // pred_fallthru
          _
      $region28: #{tpu_custom_call.1} parent=5 // pred_fallthru
        _
      %p399 = scmp.le.s32.totalorder 2, %s17
      // Predicated region
      $region45: #{tpu_custom_call.1} parent=5 // pred_check
        %p400 = pneg %p399
      $region46: #{tpu_custom_call.1} parent=5 // pred_check_branch
        %402 = sbr.rel (%p400) target = $region48
      $region47: #{tpu_custom_call.1} parent=5 // pred_region
        %s403 = ssub.s32 %s17, 2
        // Predicated region
        $region49: #{tpu_custom_call.1} parent=47 // pred_check
          %p404 = pneg %p135
        $region50: #{tpu_custom_call.1} parent=47 // pred_check_branch
          %406 = sbr.rel (%p404) target = $region52
        $region51: #{tpu_custom_call.1} parent=47 // pred_region
          %s407 = sand.u32 %s120, 1
          %s408 = scalar_lea.sflag [#allocation4], %s407
          %s409 = sand.u32 %s120, 1
          %s410 = smul.addr %s409, 4
          %s411 = scalar_lea.vmem [#allocation7], %s410
          %413 = dma.done %s408, 64
        $region52: #{tpu_custom_call.1} parent=47 // pred_fallthru
          _
      $region48: #{tpu_custom_call.1} parent=5 // pred_fallthru
        _
    $region6: #{tpu_custom_call.1} parent=1 // loop_footer
      %s21 = sadd.s32 1, %s17
    $region7: #{tpu_custom_call.1} parent=1 // loop_footer_branch
      %16 = sbr.rel target = $region3
    $region8: #{tpu_custom_call.1} parent=1 // loop_exit
      _
    %414 = vsyncpa [#allocation3], 1
    %s415 = scalar_lea.sflag [#allocation3], 1
    %416 = vsyncpa %s415, 1
    %417 = vsyncpa [#allocation6], 1
    %s418 = scalar_lea.sflag [#allocation6], 1
    %419 = vsyncpa %s418, 1
    %420 = vsyncpa [#allocation4], 1
    %s421 = scalar_lea.sflag [#allocation4], 1
    %422 = vsyncpa %s421, 1

</llo_original>
